<compile_context>
chip_gen: v6e
topology: v6e:2x2x1
jax: 0.10.0
libtpu: 0.0.40
codegen_flags: <defaults>
</compile_context>

<pallas_src>
import jax
import jax.numpy as jnp
from jax.experimental import pallas as pl
from jax.experimental.pallas import tpu as pltpu


_LANE = 128


def _round_up(x, m):
    return (x + m - 1) // m * m


def _vmem_capacity_bytes():
    """Per-core VMEM capacity; conservative (v7x) fallback if query fails."""
    try:
        return int(pltpu.get_tpu_info().vmem_capacity_bytes)
    except Exception:
        return 64 * 1024 * 1024


def _heads_kernel(cls_ref, wenc_ref, benc_ref, wcls_ref, bcls_ref, out_ref):
    """Fused classifier head for one (LC tile, batch tile) grid point.

    pooled = tanh(cls @ Wenc + benc)   -- recomputed per step (cheap, hidden)
    logits = pooled @ Wcls + bcls      -- bf16 MXU, f32 accumulate
    """
    acc = jnp.dot(cls_ref[...], wenc_ref[...],
                  preferred_element_type=jnp.float32)
    # bias add + tanh kept in f32 (v5e VPU/EUP have no bf16 support).
    pooled = jnp.tanh(acc + benc_ref[...]).astype(jnp.bfloat16)
    out_ref[...] = (
        jnp.dot(pooled, wcls_ref[...], preferred_element_type=jnp.float32)
        + bcls_ref[...]
    )


def multilabel_heads(cls_emb, w_enc, b_enc, w_cls_flat, b_cls_flat,
                     *, block_b, block_lc, vmem_limit_bytes):
    """cls_emb: (B_pad, E) bf16 -> flat padded logits (B_pad, LC_pad) f32."""
    Bp, E = cls_emb.shape
    H = w_enc.shape[1]
    LCp = w_cls_flat.shape[1]
    n_lc = LCp // block_lc
    n_b = Bp // block_b
    # LC outer, batch inner: the heads-weight block index only changes on the
    # outer axis, so w_cls_flat streams from HBM exactly once.
    grid = (n_lc, n_b)

    cost = pl.CostEstimate(
        flops=2 * Bp * E * H * n_lc + 2 * Bp * H * LCp,
        transcendentals=Bp * H * n_lc,
        bytes_accessed=(cls_emb.size * 2 * n_lc + w_enc.size * 2 + H * 4
                        + w_cls_flat.size * 2 + b_cls_flat.size * 4
                        + Bp * LCp * 4),
    )

    return pl.pallas_call(
        _heads_kernel,
        out_shape=jax.ShapeDtypeStruct((Bp, LCp), jnp.float32),
        grid_spec=pltpu.PrefetchScalarGridSpec(
            num_scalar_prefetch=0,
            grid=grid,
            in_specs=[
                pl.BlockSpec((block_b, E), lambda l, b: (b, 0)),   # CLS tile
                pl.BlockSpec((E, H), lambda l, b: (0, 0)),         # encoder W
                pl.BlockSpec((1, H), lambda l, b: (0, 0)),         # encoder b
                pl.BlockSpec((H, block_lc), lambda l, b: (0, l)),  # heads W
                pl.BlockSpec((1, block_lc), lambda l, b: (0, l)),  # heads b
            ],
            out_specs=pl.BlockSpec((block_b, block_lc), lambda l, b: (b, l)),
        ),
        compiler_params=pltpu.CompilerParams(
            # Every grid point is independent (pooled recomputed per step),
            # so both axes are parallel -> megacore can split either axis.
            dimension_semantics=("parallel", "parallel"),
            vmem_limit_bytes=vmem_limit_bytes,
        ),
        cost_estimate=cost,
    )(cls_emb, w_enc, b_enc, w_cls_flat, b_cls_flat)


def _pick_tiles(B, E, H, LCp):
    """Derive (block_b, block_lc, vmem_limit) from the per-chip VMEM budget."""
    # bf16 operands -> 16 sublanes per vreg; up to 256 fills the v6e/v7x MXU M
    # dim (also correct, merely sub-optimal, on v5e's 128-wide MXU).
    block_b = min(256, _round_up(max(B, 1), 16))

    vmem_cap = _vmem_capacity_bytes()
    # ~48 MiB on v7x (64 MiB parts), 96 MiB on v5e/v6e (128 MiB parts).
    vmem_limit = min(vmem_cap * 3 // 4, 96 * 1024 * 1024)

    # Double-buffered blocks whose size does not depend on block_lc.
    fixed = 2 * (block_b * E * 2) + 2 * (E * H * 2) + 2 * (H * 4)
    headroom = 4 * 1024 * 1024
    budget = max(vmem_limit - fixed - headroom, 1 * 1024 * 1024)
    # Per LC lane, double buffered: heads-W column (bf16) + out column (f32)
    # + bias element (f32).
    per_lane = 2 * (H * 2 + block_b * 4 + 4)
    block_lc = budget // per_lane
    block_lc = max(_LANE, min(4096, (block_lc // _LANE) * _LANE))
    block_lc = min(block_lc, LCp)
    while LCp % block_lc != 0:          # LCp is a multiple of 128 -> terminates
        block_lc -= _LANE
    return block_b, block_lc, vmem_limit


def prepare_params(params, num_labels, num_classes, lane=_LANE):
    """One-time weight preparation, hoisted out of the per-call forward path."""
    w_cls, b_cls = params["w_cls"], params["b_cls"]
    L, C, H = w_cls.shape
    assert (L, C) == (num_labels, num_classes)
    LC = L * C
    LCp = _round_up(LC, lane)
    # nn.Linear weights (L, C, H) -> (H, L*C) so logits = pooled @ Wcls + b
    # matches pooled @ w_cls[l].T per label; zero-pad the lane dim to 128x so
    # the kernel's output block is lane-dense (unmasked full-lane stores).
    w_flat = jnp.transpose(w_cls, (2, 0, 1)).reshape(H, LC)
    w_flat = jnp.pad(w_flat, ((0, 0), (0, LCp - LC))).astype(jnp.bfloat16)
    b_flat = jnp.pad(b_cls.reshape(1, LC),
                     ((0, 0), (0, LCp - LC))).astype(jnp.float32)
    return {
        "emb_table": params["emb_table"],
        "w_enc": params["w_enc"].astype(jnp.bfloat16),
        "b_enc": params["b_enc"].reshape(1, -1).astype(jnp.float32),
        "w_cls_flat": w_flat,
        "b_cls_flat": b_flat,
        "lc": LC,
        "lc_padded": LCp,
        "num_labels": L,
        "num_classes": C,
    }


def forward(input_ids, attention_mask, prep):
    """Mirrors MultiLabelMultiClassModel.forward (synthetic encoder stand-in)."""
    # --- glue: only the CLS token feeds the heads, so gather just token 0 ---
    cls_ids = input_ids[:, 0]
    cls_emb = jnp.take(prep["emb_table"], cls_ids, axis=0)
    cls_emb = cls_emb * attention_mask[:, 0:1].astype(cls_emb.dtype)

    B, E = cls_emb.shape
    H = prep["w_enc"].shape[1]
    LCp = prep["lc_padded"]

    block_b, block_lc, vmem_limit = _pick_tiles(B, E, H, LCp)
    Bp = _round_up(B, block_b)
    cls_emb = jnp.pad(cls_emb, ((0, Bp - B), (0, 0))).astype(jnp.bfloat16)

    out_flat = multilabel_heads(
        cls_emb, prep["w_enc"], prep["b_enc"],
        prep["w_cls_flat"], prep["b_cls_flat"],
        block_b=block_b, block_lc=block_lc, vmem_limit_bytes=vmem_limit)

    return out_flat[:B, :prep["lc"]].reshape(
        B, prep["num_labels"], prep["num_classes"])


def _reference(input_ids, attention_mask, params, num_labels, num_classes):
    """Pure-JAX f32 reference mirroring the original module's forward."""
    emb_table, w_enc, b_enc, w_cls, b_cls = (
        params["emb_table"], params["w_enc"], params["b_enc"],
        params["w_cls"], params["b_cls"],
    )
    embeds = jnp.take(emb_table, input_ids, axis=0)
    embeds = embeds * attention_mask[..., None].astype(embeds.dtype)
    cls_emb = embeds[:, 0, :]
    pooled = jnp.tanh(cls_emb @ w_enc + b_enc)
    logits = jnp.stack(
        [pooled @ w_cls[l].T + b_cls[l] for l in range(num_labels)], axis=1)
    return logits


if __name__ == "__main__":
    # small shapes consistent with the forward: (batch, seq) token inputs
    B, S = 2, 8
    VOCAB, EMB, HIDDEN = 100, 32, 32
    NUM_LABELS, NUM_CLASSES = 3, 4

    key = jax.random.PRNGKey(0)
    k_ids, k_emb, k_we, k_be, k_wc, k_bc = jax.random.split(key, 6)

    input_ids = jax.random.randint(k_ids, (B, S), 0, VOCAB, dtype=jnp.int32)
    attention_mask = jnp.ones((B, S), dtype=jnp.int32)

    params = {
        "emb_table": jax.random.normal(k_emb, (VOCAB, EMB), jnp.float32) * 0.02,
        "w_enc": jax.random.normal(k_we, (EMB, HIDDEN), jnp.float32) * 0.1,
        "b_enc": jax.random.normal(k_be, (HIDDEN,), jnp.float32) * 0.01,
        # nn.Linear weight layout: (out_features=num_classes, in_features=hidden)
        "w_cls": jax.random.normal(
            k_wc, (NUM_LABELS, NUM_CLASSES, HIDDEN), jnp.float32) * 0.1,
        "b_cls": jax.random.normal(
            k_bc, (NUM_LABELS, NUM_CLASSES), jnp.float32) * 0.01,
    }

    # one-time parameter prep (flatten / pad / bf16 cast) outside the hot path
    prep = jax.tree_util.tree_map(
        lambda x: jax.block_until_ready(x) if isinstance(x, jax.Array) else x,
        prepare_params(params, NUM_LABELS, NUM_CLASSES))

    logits = forward(input_ids, attention_mask, prep)
    logits = jax.block_until_ready(logits)

    ref = _reference(input_ids, attention_mask, params, NUM_LABELS, NUM_CLASSES)
    assert logits.shape == (B, NUM_LABELS, NUM_CLASSES), logits.shape
    # bf16 MXU operands -> slightly looser tolerance than pure-f32
    assert jnp.allclose(logits, ref, atol=2e-2, rtol=2e-2), "mismatch vs reference"

    print("KERNEL_OK")
</pallas_src>

<mosaic_0001>
module attributes {stable_mosaic.version = 11 : i64} {
  func.func @_heads_kernel(%arg0: i32, %arg1: i32, %arg2: memref<16x32xbf16, #tpu.memory_space<vmem>>, %arg3: memref<32x32xbf16, #tpu.memory_space<vmem>>, %arg4: memref<1x32xf32, #tpu.memory_space<vmem>>, %arg5: memref<32x128xbf16, #tpu.memory_space<vmem>>, %arg6: memref<1x128xf32, #tpu.memory_space<vmem>>, %arg7: memref<16x128xf32, #tpu.memory_space<vmem>>) attributes {dimension_semantics = [#tpu.dimension_semantics<parallel>, #tpu.dimension_semantics<parallel>], iteration_bounds = array<i64: 1, 1>, scalar_prefetch = 0 : i64, scratch_operands = 0 : i64, tpu.core_type = #tpu.core_type<tc>, window_params = [{transform_indices = @transform_0, window_bounds = array<i64: 16, 32>}, {pipeline_mode = #tpu.pipeline_mode<synchronous>, transform_indices = @transform_1, window_bounds = array<i64: 32, 32>}, {pipeline_mode = #tpu.pipeline_mode<synchronous>, transform_indices = @transform_2, window_bounds = array<i64: 1, 32>}, {transform_indices = @transform_3, window_bounds = array<i64: 32, 128>}, {transform_indices = @transform_4, window_bounds = array<i64: 1, 128>}, {transform_indices = @transform_5, window_bounds = array<i64: 16, 128>}]} {
    %c0 = arith.constant 0 : index
    %c0_0 = arith.constant 0 : index
    %0 = vector.load %arg2[%c0, %c0_0] : memref<16x32xbf16, #tpu.memory_space<vmem>>, vector<16x32xbf16>
    %c0_1 = arith.constant 0 : index
    %c0_2 = arith.constant 0 : index
    %1 = vector.load %arg3[%c0_1, %c0_2] : memref<32x32xbf16, #tpu.memory_space<vmem>>, vector<32x32xbf16>
    %cst = arith.constant dense<0.000000e+00> : vector<16x32xf32>
    %2 = tpu.matmul %0, %1, %cst {dimension_numbers = #tpu.dot_dimension_numbers<[1], [0], [0], [1], [0, 0, 1, 1], [], []>} : vector<16x32xbf16>, vector<32x32xbf16>, vector<16x32xf32> -> vector<16x32xf32>
    %c0_3 = arith.constant 0 : index
    %c0_4 = arith.constant 0 : index
    %3 = vector.load %arg4[%c0_3, %c0_4] : memref<1x32xf32, #tpu.memory_space<vmem>>, vector<1x32xf32>
    %4 = vector.broadcast %3 : vector<1x32xf32> to vector<16x32xf32>
    %5 = arith.addf %2, %4 : vector<16x32xf32>
    %6 = math.tanh %5 : vector<16x32xf32>
    %7 = arith.truncf %6 : vector<16x32xf32> to vector<16x32xbf16>
    %c0_5 = arith.constant 0 : index
    %c0_6 = arith.constant 0 : index
    %8 = vector.load %arg5[%c0_5, %c0_6] : memref<32x128xbf16, #tpu.memory_space<vmem>>, vector<32x128xbf16>
    %cst_7 = arith.constant dense<0.000000e+00> : vector<16x128xf32>
    %9 = tpu.matmul %7, %8, %cst_7 {dimension_numbers = #tpu.dot_dimension_numbers<[1], [0], [0], [1], [0, 0, 1, 1], [], []>} : vector<16x32xbf16>, vector<32x128xbf16>, vector<16x128xf32> -> vector<16x128xf32>
    %c0_8 = arith.constant 0 : index
    %c0_9 = arith.constant 0 : index
    %10 = vector.load %arg6[%c0_8, %c0_9] : memref<1x128xf32, #tpu.memory_space<vmem>>, vector<1x128xf32>
    %11 = vector.broadcast %10 : vector<1x128xf32> to vector<16x128xf32>
    %12 = arith.addf %9, %11 : vector<16x128xf32>
    %c0_10 = arith.constant 0 : index
    %c0_11 = arith.constant 0 : index
    %13 = vector.load %arg7[%c0_10, %c0_11] : memref<16x128xf32, #tpu.memory_space<vmem>>, vector<16x128xf32>
    tpu.vector_store %arg7[%c0_10, %c0_11], %12 {strides = array<i32>} : memref<16x128xf32, #tpu.memory_space<vmem>>, vector<16x128xf32>,
    return
  }
  func.func @transform_0(%arg0: i32, %arg1: i32) -> (i32, i32) {
    %c0_i32 = arith.constant 0 : i32
    %c0_i32_0 = arith.constant 0 : i32
    return %arg1, %c0_i32 : i32, i32
  }
  func.func @transform_1(%arg0: i32, %arg1: i32) -> (i32, i32) {
    %c0_i32 = arith.constant 0 : i32
    %c0_i32_0 = arith.constant 0 : i32
    %c0_i32_1 = arith.constant 0 : i32
    return %c0_i32, %c0_i32_0 : i32, i32
  }
  func.func @transform_2(%arg0: i32, %arg1: i32) -> (i32, i32) {
    %c0_i32 = arith.constant 0 : i32
    %c0_i32_0 = arith.constant 0 : i32
    %c0_i32_1 = arith.constant 0 : i32
    return %c0_i32, %c0_i32_0 : i32, i32
  }
  func.func @transform_3(%arg0: i32, %arg1: i32) -> (i32, i32) {
    %c0_i32 = arith.constant 0 : i32
    %c0_i32_0 = arith.constant 0 : i32
    return %c0_i32, %arg0 : i32, i32
  }
  func.func @transform_4(%arg0: i32, %arg1: i32) -> (i32, i32) {
    %c0_i32 = arith.constant 0 : i32
    %c0_i32_0 = arith.constant 0 : i32
    return %c0_i32, %arg0 : i32, i32
  }
  func.func @transform_5(%arg0: i32, %arg1: i32) -> (i32, i32) {
    %c0_i32 = arith.constant 0 : i32
    return %arg1, %arg0 : i32, i32
  }
}

</mosaic_0001>

<llo_original>
// kernel: tpu_custom_call.1
$region0: #{tpu_custom_call.1}
  #allocation0 [shape = 'u32[]', space=smem, size = 0x4, offset = 0x4, fixed_abs, tag = 'smem constant byte address 0x4 - core index']
  #allocation1 [shape = 'u32[144,128]{1,0:T(1,128)}', space=vmem, size = 0x12000, scoped, tag = 'internal scratch']
  %s0 = inlined_call_operand.hbm [shape: bf16[16,32], index: 0, kind: input, shape index: {}]
  %s1 = inlined_call_operand.hbm [shape: bf16[32,32], index: 1, kind: input, shape index: {}]
  %s2 = inlined_call_operand.vmem [shape: f32[1,32], index: 2, kind: input, shape index: {}]
  %s3 = inlined_call_operand.hbm [shape: bf16[32,128], index: 3, kind: input, shape index: {}]
  %s4 = inlined_call_operand.vmem [shape: f32[1,128], index: 4, kind: input, shape index: {}]
  %s5 = inlined_call_operand.hbm [shape: f32[16,128], index: 5, kind: output, shape index: {}]
  %s6 = sld [smem:[#allocation0]]
  $region42: #{tpu_custom_call.1} parent=0
    _
  %s8 = ssub.s32 1, %s6
  %s9 = scalar_select 0, %s8, %s6
  $region1: #{tpu_custom_call.1} parent=0
    #allocation2 [shape = 'u8[4096]{0}', space=vmem, size = 0x1000, scoped, tag = 'input window, operand 0, single buffered']
    #allocation3 [shape = 's32[1]{0}', space=sflag, size = 0x4, scoped, tag = 'scoped memory for tpu_custom_call.1']
    #allocation4 [shape = 's32[1]{0}', space=sflag, size = 0x4, scoped, tag = 'scoped memory for tpu_custom_call.1']
    #allocation5 [shape = 'u8[8192]{0}', space=vmem, size = 0x2000, scoped, tag = 'input window, operand 1, single buffered']
    #allocation6 [shape = 's32[1]{0}', space=sflag, size = 0x4, scoped, tag = 'scoped memory for tpu_custom_call.1']
    #allocation7 [shape = 'u8[8192]{0}', space=vmem, size = 0x2000, scoped, tag = 'input window, operand 3, single buffered']
    #allocation8 [shape = 'u8[8192]{0}', space=vmem, size = 0x2000, scoped, tag = 'output window, operand 0, single buffered']
    %10 = vsyncpa [#allocation3], 0
    %11 = vsyncpa [#allocation6], 0
    %12 = vsyncpa [#allocation4], 0
    // Predicated region
    $region2: #{tpu_custom_call.1} parent=1 // pred_check
      _
    $region3: #{tpu_custom_call.1} parent=1 // pred_check_branch
      %14 = sbr.rel (0) target = $region5
    $region4: #{tpu_custom_call.1} parent=1 // pred_region
      %s16 = ssub.s32 128, 128
      %17 = vsyncadd [#allocation3], %s16
      %s18 = sshll.u32 [#allocation2], 4
      %s19 = int_to_ptr.vmem [resolvable:$true] %s18
      %24 = dma.hbm_to_vmem [thread:$0]  %s0, 128, %s19, [#allocation3], 64, 64, 4
    $region5: #{tpu_custom_call.1} parent=1 // pred_fallthru
      _
    // Predicated region
    $region6: #{tpu_custom_call.1} parent=1 // pred_check
      _
    $region7: #{tpu_custom_call.1} parent=1 // pred_check_branch
      %26 = sbr.rel (0) target = $region9
    $region8: #{tpu_custom_call.1} parent=1 // pred_region
      %s28 = ssub.s32 256, 256
      %29 = vsyncadd [#allocation6], %s28
      %s30 = sshll.u32 [#allocation5], 4
      %s31 = int_to_ptr.vmem [resolvable:$true] %s30
      %36 = dma.hbm_to_vmem [thread:$0]  %s1, 256, %s31, [#allocation6], 64, 64, 4
    $region9: #{tpu_custom_call.1} parent=1 // pred_fallthru
      _
    // Predicated region
    $region10: #{tpu_custom_call.1} parent=1 // pred_check
      _
    $region11: #{tpu_custom_call.1} parent=1 // pred_check_branch
      %38 = sbr.rel (0) target = $region13
    $region12: #{tpu_custom_call.1} parent=1 // pred_region
      _
    $region13: #{tpu_custom_call.1} parent=1 // pred_fallthru
      _
    // Predicated region
    $region14: #{tpu_custom_call.1} parent=1 // pred_check
      _
    $region15: #{tpu_custom_call.1} parent=1 // pred_check_branch
      %40 = sbr.rel (0) target = $region17
    $region16: #{tpu_custom_call.1} parent=1 // pred_region
      %s42 = ssub.s32 256, 256
      %43 = vsyncadd [#allocation6], %s42
      %s44 = sshll.u32 [#allocation7], 4
      %s45 = int_to_ptr.vmem [resolvable:$true] %s44
      %50 = dma.hbm_to_vmem [thread:$0]  %s3, 256, %s45, [#allocation6], 64, 64, 4
    $region17: #{tpu_custom_call.1} parent=1 // pred_fallthru
      _
    // Predicated region
    $region18: #{tpu_custom_call.1} parent=1 // pred_check
      _
    $region19: #{tpu_custom_call.1} parent=1 // pred_check_branch
      %52 = sbr.rel (0) target = $region21
    $region20: #{tpu_custom_call.1} parent=1 // pred_region
      _
    $region21: #{tpu_custom_call.1} parent=1 // pred_fallthru
      _
    // Predicated region
    $region22: #{tpu_custom_call.1} parent=1 // pred_check
      _
    $region23: #{tpu_custom_call.1} parent=1 // pred_check_branch
      %54 = sbr.rel (0) target = $region25
    $region24: #{tpu_custom_call.1} parent=1 // pred_region
      %55 = dma.done [#allocation3], 128
    $region25: #{tpu_custom_call.1} parent=1 // pred_fallthru
      _
    // Predicated region
    $region26: #{tpu_custom_call.1} parent=1 // pred_check
      _
    $region27: #{tpu_custom_call.1} parent=1 // pred_check_branch
      %57 = sbr.rel (0) target = $region29
    $region28: #{tpu_custom_call.1} parent=1 // pred_region
      %58 = dma.done [#allocation6], 256
    $region29: #{tpu_custom_call.1} parent=1 // pred_fallthru
      _
    // Predicated region
    $region30: #{tpu_custom_call.1} parent=1 // pred_check
      _
    $region31: #{tpu_custom_call.1} parent=1 // pred_check_branch
      %60 = sbr.rel (0) target = $region33
    $region32: #{tpu_custom_call.1} parent=1 // pred_region
      %61 = dma.done [#allocation6], 256
    $region33: #{tpu_custom_call.1} parent=1 // pred_fallthru
      _
    %v63 = vld [vmem:[#allocation2] sm:$0xf]
    %v64 = vld [vmem:[#allocation2 + $0x4] sm:$0xf]
    %v65 = vld [vmem:[#allocation5] sm:$0xf]
    %v66 = vld [vmem:[#allocation5 + $0x4] sm:$0xf]
    %v67 = vld [vmem:[#allocation5 + $0x8] sm:$0xf]
    %v68 = vld [vmem:[#allocation5 + $0xc] sm:$0xf]
    %v69 = vld [vmem:[%s2] sm:$0x1]
    %v71 = vlaneseq
    %v72 = vshrl.u32 %v71, 7
    %v73 = vsub.s32 0, %v72
    %v74 = vrot.slane %v69, %v73
    %v78 = vunpack.c.l.b16 %v63
    %v79 = vunpack.c.l.b16 %v64
    %v80 = vpack.c.b16 %v79, %v78
    %v85 = vunpack.c.l.b16 %v65
    %v86 = vunpack.c.l.b16 %v66
    %v87 = vunpack.c.l.b16 %v67
    %v88 = vunpack.c.l.b16 %v68
    %v89 = vpack.c.b16 %v86, %v85
    %v90 = vpack.c.b16 %v88, %v87
    %vm93 = vcmask 261120
    %v95 = vsel %vm93, %v80, 0
    %97 = vmatprep.subr.bf16.mxu0 0
    %98 = vmatpush1.bf16.msra.mxu0 0
    %99 = vmatprep.subr.bf16.mxu0 0
    %100 = vmatpush1.bf16.msra.mxu0 0
    %101 = vmatprep.subr.bf16.mxu0 0
    %102 = vmatpush1.bf16.msra.mxu0 0
    %103 = vmatprep.subr.bf16.mxu0 0
    %104 = vmatpush1.bf16.msra.mxu0 0
    %105 = vmatprep.subr.bf16.mxu0 0
    %106 = vmatpush1.bf16.msra.mxu0 0
    %107 = vmatprep.subr.bf16.mxu0 0
    %108 = vmatpush1.bf16.msra.mxu0 0
    %109 = vmatprep.subr.bf16.mxu0 0
    %110 = vmatpush1.bf16.msra.mxu0 %v90
    %111 = vmatprep.subr.bf16.mxu0 0
    %112 = vmatpush1.bf16.msra.mxu0 %v89
    %113 = vmatprep.subr.bf16.mxu0 0
    %114 = vmatpush2.bf16.msra.mxu0 0
    %115 = vmatprep.subr.bf16.mxu0 0
    %116 = vmatpush2.bf16.msra.mxu0 0
    %117 = vmatprep.subr.bf16.mxu0 0
    %118 = vmatpush2.bf16.msra.mxu0 0
    %119 = vmatprep.subr.bf16.mxu0 0
    %120 = vmatpush2.bf16.msra.mxu0 0
    %121 = vmatprep.subr.bf16.mxu0 0
    %122 = vmatpush2.bf16.msra.mxu0 0
    %123 = vmatprep.subr.bf16.mxu0 0
    %124 = vmatpush2.bf16.msra.mxu0 0
    %125 = vmatprep.subr.bf16.mxu0 0
    %126 = vmatpush2.bf16.msra.mxu0 0
    %127 = vmatprep.subr.bf16.mxu0 0
    %128 = vmatpush2.bf16.msra.mxu0 0
    %129 = vmatprep.mubr.bf16.mxu0 0
    %130 = vmatmul.mubr.bf16.gmra.mxu0 %v95
    %v131 = vpop.f32.mrf.mxu0
    %v132 = vadd.f32 %v74, %v131
    %v133 = vpop.f32.mrf.mxu0
    %v134 = vpop.f32.mrf.mxu0
    %v135 = vadd.f32 %v74, %v134
    %v136 = vpop.f32.mrf.mxu0
    %137 = vdwg.mxu0
    %v138 = vtanh.pop %v132
    %v139 = vtanh.pop %v135
    %v140 = vpack.c.bf16 %v139, %v138
    %v141 = vld [vmem:[#allocation7] sm:$0xf]
    %v142 = vld [vmem:[#allocation7 + $0x4] sm:$0xf]
    %v143 = vld [vmem:[#allocation7 + $0x8] sm:$0xf]
    %v144 = vld [vmem:[#allocation7 + $0xc] sm:$0xf]
    %v145 = vld [vmem:[%s4] sm:$0x1]
    %v147 = vlaneseq
    %v148 = vshrl.u32 %v147, 7
    %v149 = vsub.s32 0, %v148
    %v150 = vrot.slane %v145, %v149
    %v156 = vunpack.c.l.b16 %v141
    %v157 = vunpack.c.l.b16 %v142
    %v158 = vunpack.c.l.b16 %v143
    %v159 = vunpack.c.l.b16 %v144
    %v160 = vpack.c.b16 %v157, %v156
    %v161 = vpack.c.b16 %v159, %v158
    %v165 = vsel %vm93, %v140, 0
    %167 = vmatprep.subr.bf16.mxu0 0
    %168 = vmatpush1.bf16.msra.mxu0 0
    %169 = vmatprep.subr.bf16.mxu0 0
    %170 = vmatpush1.bf16.msra.mxu0 0
    %171 = vmatprep.subr.bf16.mxu0 0
    %172 = vmatpush1.bf16.msra.mxu0 0
    %173 = vmatprep.subr.bf16.mxu0 0
    %174 = vmatpush1.bf16.msra.mxu0 0
    %175 = vmatprep.subr.bf16.mxu0 0
    %176 = vmatpush1.bf16.msra.mxu0 0
    %177 = vmatprep.subr.bf16.mxu0 0
    %178 = vmatpush1.bf16.msra.mxu0 0
    %179 = vmatprep.subr.bf16.mxu0 0
    %180 = vmatpush1.bf16.msra.mxu0 %v161
    %181 = vmatprep.subr.bf16.mxu0 0
    %182 = vmatpush1.bf16.msra.mxu0 %v160
    %183 = vmatprep.subr.bf16.mxu0 0
    %184 = vmatpush2.bf16.msra.mxu0 0
    %185 = vmatprep.subr.bf16.mxu0 0
    %186 = vmatpush2.bf16.msra.mxu0 0
    %187 = vmatprep.subr.bf16.mxu0 0
    %188 = vmatpush2.bf16.msra.mxu0 0
    %189 = vmatprep.subr.bf16.mxu0 0
    %190 = vmatpush2.bf16.msra.mxu0 0
    %191 = vmatprep.subr.bf16.mxu0 0
    %192 = vmatpush2.bf16.msra.mxu0 0
    %193 = vmatprep.subr.bf16.mxu0 0
    %194 = vmatpush2.bf16.msra.mxu0 0
    %195 = vmatprep.subr.bf16.mxu0 0
    %196 = vmatpush2.bf16.msra.mxu0 0
    %197 = vmatprep.subr.bf16.mxu0 0
    %198 = vmatpush2.bf16.msra.mxu0 0
    %199 = vmatprep.mubr.bf16.mxu0 0
    %200 = vmatmul.mubr.bf16.gmra.mxu0 %v165
    %v201 = vpop.f32.mrf.mxu0
    %v202 = vadd.f32 %v150, %v201
    %v203 = vpop.f32.mrf.mxu0
    %v204 = vpop.f32.mrf.mxu0
    %v205 = vadd.f32 %v150, %v204
    %v206 = vpop.f32.mrf.mxu0
    %207 = vdwg.mxu0
    %208 = vst [vmem:[#allocation8] sm:$0xff] %v202
    %209 = vst [vmem:[#allocation8 + $0x8] sm:$0xff] %v205
    // Predicated region
    $region34: #{tpu_custom_call.1} parent=1 // pred_check
      _
    $region35: #{tpu_custom_call.1} parent=1 // pred_check_branch
      %211 = sbr.rel (0) target = $region37
    $region36: #{tpu_custom_call.1} parent=1 // pred_region
      %s213 = ssub.s32 256, 256
      %214 = vsyncadd [#allocation4], %s213
      %s215 = sshll.u32 [#allocation8], 4
      %s216 = int_to_ptr.vmem [resolvable:$true] %s215
      %221 = dma.vmem_to_hbm [thread:$0]  %s216, 256, %s5, [#allocation4], 128, 128, 8
    $region37: #{tpu_custom_call.1} parent=1 // pred_fallthru
      _
    // Predicated region
    $region38: #{tpu_custom_call.1} parent=1 // pred_check
      _
    $region39: #{tpu_custom_call.1} parent=1 // pred_check_branch
      %223 = sbr.rel (0) target = $region41
    $region40: #{tpu_custom_call.1} parent=1 // pred_region
      %224 = dma.done [#allocation4], 256
    $region41: #{tpu_custom_call.1} parent=1 // pred_fallthru
      _
    %225 = vsyncpa [#allocation3], 1
    %226 = vsyncpa [#allocation6], 1
    %227 = vsyncpa [#allocation4], 1

</llo_original>
